<compile_context>
chip_gen: v7x
topology: tpu7x:2x2x1
jax: 0.10.0
libtpu: 0.0.40
codegen_flags: <defaults>
</compile_context>

<pallas_src>
import math

import jax
import jax.numpy as jnp
from jax.experimental import pallas as pl
from jax.experimental.pallas import tpu as pltpu


# ----------------------------------------------------------------------------
# batched matmul helpers (single leading batch axis; only the two contraction
# patterns known to lower cleanly in Mosaic: A @ B and A @ B^T)
# ----------------------------------------------------------------------------
def _bmm(a, b):
    """(x, m, k) @ (x, k, n) -> (x, m, n)."""
    return jax.lax.dot_general(
        a, b, (((2,), (1,)), ((0,), (0,))), preferred_element_type=jnp.float32)


def _bmm_bt(a, b):
    """(x, m, k) @ (x, n, k)^T -> (x, m, n)."""
    return jax.lax.dot_general(
        a, b, (((2,), (2,)), ((0,), (0,))), preferred_element_type=jnp.float32)


# ----------------------------------------------------------------------------
# Pallas kernels — each is ONE invocation over the full (tiny) batch.
# ----------------------------------------------------------------------------
def _log_delta_kernel(u_ref, s_ref, v_ref, out_ref):
    """delta = (U * atan(sigma)) @ V^T for every matrix in the batch."""
    out_ref[...] = _bmm_bt(u_ref[...] * s_ref[...], v_ref[...])


def _expmap_kernel(x_ref, u_ref, s_ref, v_ref, out_ref):
    """Exp_X(Delta) = (X (V*cosS) + U*sinS) @ V^T  with Delta = U S V^T (fused V^T)."""
    v = v_ref[...]
    s = s_ref[...]
    tmp = _bmm(x_ref[...], v * jnp.cos(s)) + u_ref[...] * jnp.sin(s)
    out_ref[...] = _bmm_bt(tmp, v)


def _transport_kernel(m_ref, q_ref, qt_ref, r_ref, s_ref, sf_ref,
                      qd_ref, td_ref, rd_ref, out_ref):
    """Fused:  sf * PT_{M->B}[ Log_M(U) ].

    delta = (Qd * (sf * atan(sigma_d))) @ Rd^T            (log map, pre-scaled by sf)
    out   = (Q*(cosS-1) - (M R)*sinS) @ (Q^T delta) + delta
          = sf * (lfs_ptrans + I_n) @ Log_M(U)            (no (n,n) intermediate)
    """
    q = q_ref[...]
    s = s_ref[...]
    delta = _bmm_bt(qd_ref[...] * (td_ref[...] * sf_ref[...]), rd_ref[...])
    w = q * (jnp.cos(s) - 1.0) - _bmm(m_ref[...], r_ref[...]) * jnp.sin(s)
    out_ref[...] = _bmm(w, _bmm(qt_ref[...], delta)) + delta


# ----------------------------------------------------------------------------
# Pallas wrappers — single grid step, whole-array blocks (a few KB total).
# ----------------------------------------------------------------------------
def _full_spec(shape):
    return pl.BlockSpec(shape, lambda i, _s=shape: (0,) * len(_s))


_SINGLE_STEP = pltpu.CompilerParams(dimension_semantics=("arbitrary",))


def _pallas_log_delta(u, theta, v):
    N, n, p = u.shape
    return pl.pallas_call(
        _log_delta_kernel,
        out_shape=jax.ShapeDtypeStruct((N, n, p), jnp.float32),
        grid=(1,),
        in_specs=[_full_spec((N, n, p)),
                  _full_spec((N, 1, p)),
                  _full_spec((N, p, p))],
        out_specs=_full_spec((N, n, p)),
        compiler_params=_SINGLE_STEP,
    )(u, theta.reshape(N, 1, p), v)


def _pallas_expmap(x, u, s, v):
    N, n, p = x.shape
    return pl.pallas_call(
        _expmap_kernel,
        out_shape=jax.ShapeDtypeStruct((N, n, p), jnp.float32),
        grid=(1,),
        in_specs=[_full_spec((N, n, p)),
                  _full_spec((N, n, p)),
                  _full_spec((N, 1, p)),
                  _full_spec((N, p, p))],
        out_specs=_full_spec((N, n, p)),
        compiler_params=_SINGLE_STEP,
    )(x, u, s.reshape(N, 1, p), v)


def _pallas_transport(M, Q, R, s_tilde, shifting_factor, Qd, thetad, Rd):
    """Fused log-reconstruction + parallel transport + scaling, one invocation."""
    Bsz, C, n, p = Qd.shape
    N = Bsz * C

    def bcast(a):  # (C, ...) -> (N, ...) ; few KB, done once in XLA
        return jnp.broadcast_to(a[None], (Bsz,) + a.shape).reshape((N,) + a.shape[1:])

    m = bcast(M)
    q = bcast(Q)
    qt = bcast(jnp.swapaxes(Q, -1, -2))          # pre-transposed so the kernel only
    r = bcast(R)                                 # needs A@B / A@B^T contractions
    s = bcast(s_tilde.reshape(C, 1, p))
    sf = bcast(shifting_factor.reshape(C, 1, 1).astype(jnp.float32))
    qd = Qd.reshape(N, n, p)
    td = thetad.reshape(N, 1, p)
    rd = Rd.reshape(N, p, p)

    out = pl.pallas_call(
        _transport_kernel,
        out_shape=jax.ShapeDtypeStruct((N, n, p), jnp.float32),
        grid=(1,),
        in_specs=[_full_spec((N, n, p)),   # M (channel mean)
                  _full_spec((N, n, p)),   # Q      of Log_M(B)
                  _full_spec((N, p, n)),   # Q^T
                  _full_spec((N, p, p)),   # R
                  _full_spec((N, 1, p)),   # atan(sigma)
                  _full_spec((N, 1, 1)),   # shifting factor
                  _full_spec((N, n, p)),   # Qd     of Log_M(U)
                  _full_spec((N, 1, p)),   # atan(sigma_d)
                  _full_spec((N, p, p))],  # Rd
        out_specs=_full_spec((N, n, p)),
        compiler_params=_SINGLE_STEP,
    )(m, q, qt, r, s, sf, qd, td, rd)
    return out.reshape(Bsz, C, n, p)


# ----------------------------------------------------------------------------
# Grassmann geometry (glue: SVD / pinv stay in plain JAX)
# ----------------------------------------------------------------------------
def gr_identity_batch(*shape):
    *lead, n, p = shape
    eye = jnp.eye(n, p, dtype=jnp.float32)
    return jnp.broadcast_to(eye, (*lead, n, p))


def gr_log_components(x, y):
    """SVD components (Q, atan(sigma), R) of the Grassmann log Log_x(y)."""
    # TODO(synk): torch.linalg.pinv / svd have no Pallas equivalent; plain JAX here.
    xt = jnp.swapaxes(x, -1, -2)
    yt = jnp.swapaxes(y, -1, -2)
    ytx = yt @ x
    At = yt - ytx @ xt
    Bt = jnp.linalg.pinv(ytx) @ At
    u, s, vh = jnp.linalg.svd(jnp.swapaxes(Bt, -1, -2), full_matrices=False)
    return u, jnp.arctan(s), jnp.swapaxes(vh, -1, -2)


def _flat(a, last_dims):
    lead = a.shape[:-last_dims]
    flat = a.reshape((math.prod(lead) if lead else 1,) + a.shape[-last_dims:])
    return flat, lead


def gr_logmap(x, y):
    """Log_x(y) = Q atan(sigma) R^T."""
    q, theta, r = gr_log_components(x, y)
    qf, lead = _flat(q, 2)
    tf, _ = _flat(theta, 1)
    rf, _ = _flat(r, 2)
    delta = _pallas_log_delta(qf, tf, rf)
    return delta.reshape(lead + delta.shape[-2:])


def gr_expmap(x, tangent):
    """Exp_x(tangent) via thin SVD of the tangent vector (exact 'expm' form)."""
    # TODO(synk): exp_mode='cayley' uses an external retraction; exact SVD exp map used.
    x = jnp.broadcast_to(x, tangent.shape)
    u, s, vh = jnp.linalg.svd(tangent, full_matrices=False)
    v = jnp.swapaxes(vh, -1, -2)
    xf, _ = _flat(x, 2)
    uf, _ = _flat(u, 2)
    sf, _ = _flat(s, 1)
    vf, _ = _flat(v, 2)
    out = _pallas_expmap(xf, uf, sf, vf)
    return out.reshape(tangent.shape)


def gr_dist(x, y):
    """Geodesic distance = L2 norm of principal angles."""
    _, theta, _ = gr_log_components(y, x)
    return jnp.sqrt(jnp.sum(theta * theta, axis=-1))


def gr_geodesic(x, y, t):
    return gr_expmap(x, t * gr_logmap(x, y))


# ----------------------------------------------------------------------------
# RBNGr forward
# ----------------------------------------------------------------------------
def normalization(U, B, M, shifting_factor):
    """Exp_B { s * PT_{M->B}[ Log_M(U) ] } — log-reconstruction fused into transport."""
    Qd, thetad, Rd = gr_log_components(M, U)        # (b,c,n,p), (b,c,p), (b,c,p,p)
    Q, s_tilde, R = gr_log_components(M, B)         # (c,n,p),   (c,p),   (c,p,p)
    vec_scaled = _pallas_transport(M, Q, R, s_tilde, shifting_factor, Qd, thetad, Rd)
    return gr_expmap(B, vec_scaled)


def rbngr_forward(X, bias, shift, running_mean, running_var,
                  momentum=0.1, karcher_steps=1, eps=1e-5, training=True):
    if training:
        grass = jax.lax.stop_gradient(X)
        batch_mean = grass[0]                                   # init Karcher flow
        for _ in range(karcher_steps):
            x_log = gr_logmap(batch_mean, grass)                # (b, c, n, p)
            batch_mean_tan = jnp.mean(x_log, axis=0)            # (c, n, p)
            batch_mean = gr_expmap(batch_mean, batch_mean_tan)
        dists = gr_dist(grass, batch_mean)                      # (b, c)
        batch_var = jnp.mean(dists ** 2, axis=0)[:, None, None] # (c, 1, 1)
        shifting_factor = shift / jnp.sqrt(batch_var + eps)
        mean = batch_mean
        new_running_mean = gr_geodesic(running_mean, batch_mean, momentum)
        new_running_var = (1.0 - momentum) * running_var + momentum * batch_var
    else:
        shifting_factor = shift / jnp.sqrt(running_var + eps)
        mean = running_mean
        new_running_mean, new_running_var = running_mean, running_var
    Xn = normalization(X, bias, mean, shifting_factor)
    return Xn, new_running_mean, new_running_var


# ----------------------------------------------------------------------------
# main
# ----------------------------------------------------------------------------
if __name__ == "__main__":
    key = jax.random.PRNGKey(0)
    b, c, n, p = 2, 4, 16, 4          # shape = [c, n, p] = [4, 16, 4], batch = 2

    raw = jax.random.normal(key, (b, c, n, p), dtype=jnp.float32)
    X, _ = jnp.linalg.qr(raw)         # orthonormal columns -> points on Gr(n, p)

    # deterministic parameter / buffer init (matches module __init__)
    bias = gr_identity_batch(c, n, p)             # ManifoldParameter init
    shift = jnp.ones((c, 1, 1), jnp.float32)      # nn.Parameter
    running_mean = gr_identity_batch(c, n, p)     # buffer
    running_var = jnp.ones((c, 1, 1), jnp.float32)

    out, rm, rv = rbngr_forward(X, bias, shift, running_mean, running_var,
                                momentum=0.1, karcher_steps=1, eps=1e-5,
                                training=True)
    jax.block_until_ready((out, rm, rv))
    assert out.shape == (b, c, n, p) and out.dtype == jnp.float32
    assert rm.shape == (c, n, p) and rv.shape == (c, 1, 1)
    print("KERNEL_OK")
</pallas_src>

<mosaic_0001>
module attributes {stable_mosaic.version = 11 : i64} {
  func.func @_log_delta_kernel(%arg0: i32, %arg1: memref<8x16x4xf32, #tpu.memory_space<vmem>>, %arg2: memref<8x1x4xf32, #tpu.memory_space<vmem>>, %arg3: memref<8x4x4xf32, #tpu.memory_space<vmem>>, %arg4: memref<8x16x4xf32, #tpu.memory_space<vmem>>) attributes {dimension_semantics = [#tpu.dimension_semantics<arbitrary>], iteration_bounds = array<i64: 1>, scalar_prefetch = 0 : i64, scratch_operands = 0 : i64, tpu.core_type = #tpu.core_type<tc>, window_params = [{pipeline_mode = #tpu.pipeline_mode<synchronous>, transform_indices = @transform_0, window_bounds = array<i64: 8, 16, 4>}, {pipeline_mode = #tpu.pipeline_mode<synchronous>, transform_indices = @transform_1, window_bounds = array<i64: 8, 1, 4>}, {pipeline_mode = #tpu.pipeline_mode<synchronous>, transform_indices = @transform_2, window_bounds = array<i64: 8, 4, 4>}, {pipeline_mode = #tpu.pipeline_mode<synchronous>, transform_indices = @transform_3, window_bounds = array<i64: 8, 16, 4>}]} {
    %c0 = arith.constant 0 : index
    %c0_0 = arith.constant 0 : index
    %c0_1 = arith.constant 0 : index
    %0 = vector.load %arg1[%c0, %c0_0, %c0_1] : memref<8x16x4xf32, #tpu.memory_space<vmem>>, vector<8x16x4xf32>
    %c0_2 = arith.constant 0 : index
    %c0_3 = arith.constant 0 : index
    %c0_4 = arith.constant 0 : index
    %1 = vector.load %arg2[%c0_2, %c0_3, %c0_4] : memref<8x1x4xf32, #tpu.memory_space<vmem>>, vector<8x1x4xf32>
    %2 = vector.broadcast %1 : vector<8x1x4xf32> to vector<8x16x4xf32>
    %3 = arith.mulf %0, %2 : vector<8x16x4xf32>
    %c0_5 = arith.constant 0 : index
    %c0_6 = arith.constant 0 : index
    %c0_7 = arith.constant 0 : index
    %4 = vector.load %arg3[%c0_5, %c0_6, %c0_7] : memref<8x4x4xf32, #tpu.memory_space<vmem>>, vector<8x4x4xf32>
    %cst = arith.constant dense<0.000000e+00> : vector<8x16x4xf32>
    %5 = tpu.matmul %3, %4, %cst {dimension_numbers = #tpu.dot_dimension_numbers<[2], [2], [1], [1], [0, 0, 0, 1, 1, 1], [0], [0]>} : vector<8x16x4xf32>, vector<8x4x4xf32>, vector<8x16x4xf32> -> vector<8x16x4xf32>
    %c0_8 = arith.constant 0 : index
    %c0_9 = arith.constant 0 : index
    %c0_10 = arith.constant 0 : index
    %6 = vector.load %arg4[%c0_8, %c0_9, %c0_10] : memref<8x16x4xf32, #tpu.memory_space<vmem>>, vector<8x16x4xf32>
    tpu.vector_store %arg4[%c0_8, %c0_9, %c0_10], %5 {strides = array<i32>} : memref<8x16x4xf32, #tpu.memory_space<vmem>>, vector<8x16x4xf32>,
    return
  }
  func.func @transform_0(%arg0: i32) -> (i32, i32, i32) {
    %c0_i32 = arith.constant 0 : i32
    %c0_i32_0 = arith.constant 0 : i32
    %c0_i32_1 = arith.constant 0 : i32
    %c0_i32_2 = arith.constant 0 : i32
    return %c0_i32, %c0_i32_0, %c0_i32_1 : i32, i32, i32
  }
  func.func @transform_1(%arg0: i32) -> (i32, i32, i32) {
    %c0_i32 = arith.constant 0 : i32
    %c0_i32_0 = arith.constant 0 : i32
    %c0_i32_1 = arith.constant 0 : i32
    %c0_i32_2 = arith.constant 0 : i32
    return %c0_i32, %c0_i32_0, %c0_i32_1 : i32, i32, i32
  }
  func.func @transform_2(%arg0: i32) -> (i32, i32, i32) {
    %c0_i32 = arith.constant 0 : i32
    %c0_i32_0 = arith.constant 0 : i32
    %c0_i32_1 = arith.constant 0 : i32
    %c0_i32_2 = arith.constant 0 : i32
    return %c0_i32, %c0_i32_0, %c0_i32_1 : i32, i32, i32
  }
  func.func @transform_3(%arg0: i32) -> (i32, i32, i32) {
    %c0_i32 = arith.constant 0 : i32
    %c0_i32_0 = arith.constant 0 : i32
    %c0_i32_1 = arith.constant 0 : i32
    %c0_i32_2 = arith.constant 0 : i32
    return %c0_i32, %c0_i32_0, %c0_i32_1 : i32, i32, i32
  }
}

</mosaic_0001>

<llo_original>
// kernel: tpu_custom_call.1
$region0: #{tpu_custom_call.1}
  #allocation0 [shape = 'u32[]', space=smem, size = 0x4, offset = 0x4, fixed_abs, tag = 'smem constant byte address 0x4 - core index']
  #allocation1 [shape = 'u32[144,128]{1,0:T(1,128)}', space=vmem, size = 0x12000, scoped, tag = 'internal scratch']
  %s0 = inlined_call_operand.vmem [shape: f32[8,16,4], index: 0, kind: input, shape index: {}]
  %s1 = inlined_call_operand.vmem [shape: f32[8,1,4], index: 1, kind: input, shape index: {}]
  %s2 = inlined_call_operand.vmem [shape: f32[8,4,4], index: 2, kind: input, shape index: {}]
  %s3 = inlined_call_operand.vmem [shape: f32[8,16,4], index: 3, kind: output, shape index: {}]
  %s4 = sld [smem:[#allocation0]]
  $region22: #{tpu_custom_call.1} parent=0
    _
  %s6 = ssub.s32 1, %s4
  %s7 = scalar_select 0, %s6, %s4
  // Predicated region
  $region2: #{tpu_custom_call.1} parent=0 // pred_check
    _
  $region3: #{tpu_custom_call.1} parent=0 // pred_check_branch
    %9 = sbr.rel (0) target = $region5
  $region4: #{tpu_custom_call.1} parent=0 // pred_region
    _
  $region5: #{tpu_custom_call.1} parent=0 // pred_fallthru
    _
  // Predicated region
  $region6: #{tpu_custom_call.1} parent=0 // pred_check
    _
  $region7: #{tpu_custom_call.1} parent=0 // pred_check_branch
    %11 = sbr.rel (0) target = $region9
  $region8: #{tpu_custom_call.1} parent=0 // pred_region
    _
  $region9: #{tpu_custom_call.1} parent=0 // pred_fallthru
    _
  // Predicated region
  $region10: #{tpu_custom_call.1} parent=0 // pred_check
    _
  $region11: #{tpu_custom_call.1} parent=0 // pred_check_branch
    %13 = sbr.rel (0) target = $region13
  $region12: #{tpu_custom_call.1} parent=0 // pred_region
    _
  $region13: #{tpu_custom_call.1} parent=0 // pred_fallthru
    _
  %v14 = vld [vmem:[%s0] sm:$0xff]
  %v15 = vld [vmem:[%s0 + $0x8] sm:$0xff]
  %v16 = vld [vmem:[%s0 + $0x10] sm:$0xff]
  %v17 = vld [vmem:[%s0 + $0x18] sm:$0xff]
  %v18 = vld [vmem:[%s0 + $0x20] sm:$0xff]
  %v19 = vld [vmem:[%s0 + $0x28] sm:$0xff]
  %v20 = vld [vmem:[%s0 + $0x30] sm:$0xff]
  %v21 = vld [vmem:[%s0 + $0x38] sm:$0xff]
  %v22 = vld [vmem:[%s0 + $0x40] sm:$0xff]
  %v23 = vld [vmem:[%s0 + $0x48] sm:$0xff]
  %v24 = vld [vmem:[%s0 + $0x50] sm:$0xff]
  %v25 = vld [vmem:[%s0 + $0x58] sm:$0xff]
  %v26 = vld [vmem:[%s0 + $0x60] sm:$0xff]
  %v27 = vld [vmem:[%s0 + $0x68] sm:$0xff]
  %v28 = vld [vmem:[%s0 + $0x70] sm:$0xff]
  %v29 = vld [vmem:[%s0 + $0x78] sm:$0xff]
  %v30 = vld [vmem:[%s1] sm:$0x1]
  %v31 = vld [vmem:[%s1 + $0x1] sm:$0x1]
  %v32 = vld [vmem:[%s1 + $0x2] sm:$0x1]
  %v33 = vld [vmem:[%s1 + $0x3] sm:$0x1]
  %v34 = vld [vmem:[%s1 + $0x4] sm:$0x1]
  %v35 = vld [vmem:[%s1 + $0x5] sm:$0x1]
  %v36 = vld [vmem:[%s1 + $0x6] sm:$0x1]
  %v37 = vld [vmem:[%s1 + $0x7] sm:$0x1]
  %v46 = vlaneseq
  %v47 = vshrl.u32 %v46, 7
  %v48 = vsub.s32 0, %v47
  %v49 = vrot.slane %v30, %v48
  %v50 = vlaneseq
  %v51 = vshrl.u32 %v50, 7
  %v52 = vsub.s32 0, %v51
  %v53 = vrot.slane %v31, %v52
  %v54 = vlaneseq
  %v55 = vshrl.u32 %v54, 7
  %v56 = vsub.s32 0, %v55
  %v57 = vrot.slane %v32, %v56
  %v58 = vlaneseq
  %v59 = vshrl.u32 %v58, 7
  %v60 = vsub.s32 0, %v59
  %v61 = vrot.slane %v33, %v60
  %v62 = vlaneseq
  %v63 = vshrl.u32 %v62, 7
  %v64 = vsub.s32 0, %v63
  %v65 = vrot.slane %v34, %v64
  %v66 = vlaneseq
  %v67 = vshrl.u32 %v66, 7
  %v68 = vsub.s32 0, %v67
  %v69 = vrot.slane %v35, %v68
  %v70 = vlaneseq
  %v71 = vshrl.u32 %v70, 7
  %v72 = vsub.s32 0, %v71
  %v73 = vrot.slane %v36, %v72
  %v74 = vlaneseq
  %v75 = vshrl.u32 %v74, 7
  %v76 = vsub.s32 0, %v75
  %v77 = vrot.slane %v37, %v76
  %v86 = vmul.f32 %v14, %v49
  %v87 = vmul.f32 %v15, %v49
  %v88 = vmul.f32 %v16, %v53
  %v89 = vmul.f32 %v17, %v53
  %v90 = vmul.f32 %v18, %v57
  %v91 = vmul.f32 %v19, %v57
  %v92 = vmul.f32 %v20, %v61
  %v93 = vmul.f32 %v21, %v61
  %v94 = vmul.f32 %v22, %v65
  %v95 = vmul.f32 %v23, %v65
  %v96 = vmul.f32 %v24, %v69
  %v97 = vmul.f32 %v25, %v69
  %v98 = vmul.f32 %v26, %v73
  %v99 = vmul.f32 %v27, %v73
  %v100 = vmul.f32 %v28, %v77
  %v101 = vmul.f32 %v29, %v77
  %v102 = vld [vmem:[%s2] sm:$0xf]
  %v103 = vld [vmem:[%s2 + $0x4] sm:$0xf]
  %v104 = vld [vmem:[%s2 + $0x8] sm:$0xf]
  %v105 = vld [vmem:[%s2 + $0xc] sm:$0xf]
  %v106 = vld [vmem:[%s2 + $0x10] sm:$0xf]
  %v107 = vld [vmem:[%s2 + $0x14] sm:$0xf]
  %v108 = vld [vmem:[%s2 + $0x18] sm:$0xf]
  %v109 = vld [vmem:[%s2 + $0x1c] sm:$0xf]
  %vm110 = vcmask 31744
  %v112 = vsel %vm110, %v86, 0
  %v115 = vsel %vm110, %v87, 0
  %v118 = vsel %vm110, %v102, 0
  %120 = vmatprep.subr.mxu0 0.0
  %121 = vmatpush1.xpose.msra.mxu0 %v118
  %122 = vmatprep.subr.mxu0 0.0
  %123 = vmatpush1.xpose.msra.mxu0 0.0
  %124 = vmatprep.subr.mxu0 0.0
  %125 = vmatpush1.xpose.msra.mxu0 0.0
  %126 = vmatprep.subr.mxu0 0.0
  %127 = vmatpush1.xpose.msra.mxu0 0.0
  %128 = vmatprep.subr.mxu0 0.0
  %129 = vmatpush1.xpose.msra.mxu0 0.0
  %130 = vmatprep.subr.mxu0 0.0
  %131 = vmatpush1.xpose.msra.mxu0 0.0
  %132 = vmatprep.subr.mxu0 0.0
  %133 = vmatpush1.xpose.msra.mxu0 0.0
  %134 = vmatprep.subr.mxu0 0.0
  %135 = vmatpush1.xpose.msra.mxu0 0.0
  %136 = vmatprep.subr.mxu0 0.0
  %137 = vmatpush1.xpose.msra.mxu0 0.0
  %138 = vmatprep.subr.mxu0 0.0
  %139 = vmatpush1.xpose.msra.mxu0 0.0
  %140 = vmatprep.subr.mxu0 0.0
  %141 = vmatpush1.xpose.msra.mxu0 0.0
  %142 = vmatprep.subr.mxu0 0.0
  %143 = vmatpush1.xpose.msra.mxu0 0.0
  %144 = vmatprep.subr.mxu0 0.0
  %145 = vmatpush1.xpose.msra.mxu0 0.0
  %146 = vmatprep.subr.mxu0 0.0
  %147 = vmatpush1.xpose.msra.mxu0 0.0
  %148 = vmatprep.subr.mxu0 0.0
  %149 = vmatpush1.xpose.msra.mxu0 0.0
  %150 = vmatprep.subr.mxu0 0.0
  %151 = vmatpush1.xpose.msra.mxu0 0.0
  %152 = vmatprep.subr.mxu0 0.0
  %153 = vmatpush1.xpose.msra.mxu0 0.0
  %154 = vmatprep.subr.mxu0 0.0
  %155 = vmatpush1.xpose.msra.mxu0 0.0
  %156 = vmatprep.subr.mxu0 0.0
  %157 = vmatpush1.xpose.msra.mxu0 0.0
  %158 = vmatprep.subr.mxu0 0.0
  %159 = vmatpush1.xpose.msra.mxu0 0.0
  %160 = vmatprep.subr.mxu0 0.0
  %161 = vmatpush1.xpose.msra.mxu0 0.0
  %162 = vmatprep.subr.mxu0 0.0
  %163 = vmatpush1.xpose.msra.mxu0 0.0
  %164 = vmatprep.subr.mxu0 0.0
  %165 = vmatpush1.xpose.msra.mxu0 0.0
  %166 = vmatprep.subr.mxu0 0.0
  %167 = vmatpush1.xpose.msra.mxu0 0.0
  %168 = vmatprep.subr.mxu0 0.0
  %169 = vmatpush1.xpose.msra.mxu0 0.0
  %170 = vmatprep.subr.mxu0 0.0
  %171 = vmatpush1.xpose.msra.mxu0 0.0
  %172 = vmatprep.subr.mxu0 0.0
  %173 = vmatpush1.xpose.msra.mxu0 0.0
  %174 = vmatprep.subr.mxu0 0.0
  %175 = vmatpush1.xpose.msra.mxu0 0.0
  %176 = vmatprep.subr.mxu0 0.0
  %177 = vmatpush1.xpose.msra.mxu0 0.0
  %178 = vmatprep.subr.mxu0 0.0
  %179 = vmatpush1.xpose.msra.mxu0 0.0
  %180 = vmatprep.subr.mxu0 0.0
  %181 = vmatpush1.xpose.msra.mxu0 0.0
  %182 = vmatprep.subr.mxu0 0.0
  %183 = vmatpush1.xpose.msra.mxu0 0.0
  %184 = vmatprep.mubr.f32.mxu0 0.0
  %185 = vmatmul.mubr.f32.gmra.mrb[0].mxu0 %v112
  %v186 = vpop.f32.mrb[0].mxu0
  %v187 = vadd.f32 0.0, %v186
  %v188 = vpop.f32.mrb[0].mxu0
  %189 = vmatprep.mubr.f32.mxu0 0.0
  %190 = vmatmul.mubr.f32.gmra.mrb[0].mxu0 %v115
  %v191 = vpop.f32.mrb[0].mxu0
  %v192 = vadd.f32 0.0, %v191
  %v193 = vpop.f32.mrb[0].mxu0
  %194 = vdwg.mxu0
  %v196 = vsel %vm110, %v88, 0
  %v199 = vsel %vm110, %v89, 0
  %v202 = vsel %vm110, %v103, 0
  %204 = vmatprep.subr.mxu0 0.0
  %205 = vmatpush1.xpose.msra.mxu0 %v202
  %206 = vmatprep.subr.mxu0 0.0
  %207 = vmatpush1.xpose.msra.mxu0 0.0
  %208 = vmatprep.subr.mxu0 0.0
  %209 = vmatpush1.xpose.msra.mxu0 0.0
  %210 = vmatprep.subr.mxu0 0.0
  %211 = vmatpush1.xpose.msra.mxu0 0.0
  %212 = vmatprep.subr.mxu0 0.0
  %213 = vmatpush1.xpose.msra.mxu0 0.0
  %214 = vmatprep.subr.mxu0 0.0
  %215 = vmatpush1.xpose.msra.mxu0 0.0
  %216 = vmatprep.subr.mxu0 0.0
  %217 = vmatpush1.xpose.msra.mxu0 0.0
  %218 = vmatprep.subr.mxu0 0.0
  %219 = vmatpush1.xpose.msra.mxu0 0.0
  %220 = vmatprep.subr.mxu0 0.0
  %221 = vmatpush1.xpose.msra.mxu0 0.0
  %222 = vmatprep.subr.mxu0 0.0
  %223 = vmatpush1.xpose.msra.mxu0 0.0
  %224 = vmatprep.subr.mxu0 0.0
  %225 = vmatpush1.xpose.msra.mxu0 0.0
  %226 = vmatprep.subr.mxu0 0.0
  %227 = vmatpush1.xpose.msra.mxu0 0.0
  %228 = vmatprep.subr.mxu0 0.0
  %229 = vmatpush1.xpose.msra.mxu0 0.0
  %230 = vmatprep.subr.mxu0 0.0
  %231 = vmatpush1.xpose.msra.mxu0 0.0
  %232 = vmatprep.subr.mxu0 0.0
  %233 = vmatpush1.xpose.msra.mxu0 0.0
  %234 = vmatprep.subr.mxu0 0.0
  %235 = vmatpush1.xpose.msra.mxu0 0.0
  %236 = vmatprep.subr.mxu0 0.0
  %237 = vmatpush1.xpose.msra.mxu0 0.0
  %238 = vmatprep.subr.mxu0 0.0
  %239 = vmatpush1.xpose.msra.mxu0 0.0
  %240 = vmatprep.subr.mxu0 0.0
  %241 = vmatpush1.xpose.msra.mxu0 0.0
  %242 = vmatprep.subr.mxu0 0.0
  %243 = vmatpush1.xpose.msra.mxu0 0.0
  %244 = vmatprep.subr.mxu0 0.0
  %245 = vmatpush1.xpose.msra.mxu0 0.0
  %246 = vmatprep.subr.mxu0 0.0
  %247 = vmatpush1.xpose.msra.mxu0 0.0
  %248 = vmatprep.subr.mxu0 0.0
  %249 = vmatpush1.xpose.msra.mxu0 0.0
  %250 = vmatprep.subr.mxu0 0.0
  %251 = vmatpush1.xpose.msra.mxu0 0.0
  %252 = vmatprep.subr.mxu0 0.0
  %253 = vmatpush1.xpose.msra.mxu0 0.0
  %254 = vmatprep.subr.mxu0 0.0
  %255 = vmatpush1.xpose.msra.mxu0 0.0
  %256 = vmatprep.subr.mxu0 0.0
  %257 = vmatpush1.xpose.msra.mxu0 0.0
  %258 = vmatprep.subr.mxu0 0.0
  %259 = vmatpush1.xpose.msra.mxu0 0.0
  %260 = vmatprep.subr.mxu0 0.0
  %261 = vmatpush1.xpose.msra.mxu0 0.0
  %262 = vmatprep.subr.mxu0 0.0
  %263 = vmatpush1.xpose.msra.mxu0 0.0
  %264 = vmatprep.subr.mxu0 0.0
  %265 = vmatpush1.xpose.msra.mxu0 0.0
  %266 = vmatprep.subr.mxu0 0.0
  %267 = vmatpush1.xpose.msra.mxu0 0.0
  %268 = vmatprep.mubr.f32.mxu0 0.0
  %269 = vmatmul.mubr.f32.gmra.mrb[0].mxu0 %v196
  %v270 = vpop.f32.mrb[0].mxu0
  %v271 = vadd.f32 0.0, %v270
  %v272 = vpop.f32.mrb[0].mxu0
  %273 = vmatprep.mubr.f32.mxu0 0.0
  %274 = vmatmul.mubr.f32.gmra.mrb[0].mxu0 %v199
  %v275 = vpop.f32.mrb[0].mxu0
  %v276 = vadd.f32 0.0, %v275
  %v277 = vpop.f32.mrb[0].mxu0
  %278 = vdwg.mxu0
  %v280 = vsel %vm110, %v90, 0
  %v283 = vsel %vm110, %v91, 0
  %v286 = vsel %vm110, %v104, 0
  %288 = vmatprep.subr.mxu0 0.0
  %289 = vmatpush1.xpose.msra.mxu0 %v286
  %290 = vmatprep.subr.mxu0 0.0
  %291 = vmatpush1.xpose.msra.mxu0 0.0
  %292 = vmatprep.subr.mxu0 0.0
  %293 = vmatpush1.xpose.msra.mxu0 0.0
  %294 = vmatprep.subr.mxu0 0.0
  %295 = vmatpush1.xpose.msra.mxu0 0.0
  %296 = vmatprep.subr.mxu0 0.0
  %297 = vmatpush1.xpose.msra.mxu0 0.0
  %298 = vmatprep.subr.mxu0 0.0
  %299 = vmatpush1.xpose.msra.mxu0 0.0
  %300 = vmatprep.subr.mxu0 0.0
  %301 = vmatpush1.xpose.msra.mxu0 0.0
  %302 = vmatprep.subr.mxu0 0.0
  %303 = vmatpush1.xpose.msra.mxu0 0.0
  %304 = vmatprep.subr.mxu0 0.0
  %305 = vmatpush1.xpose.msra.mxu0 0.0
  %306 = vmatprep.subr.mxu0 0.0
  %307 = vmatpush1.xpose.msra.mxu0 0.0
  %308 = vmatprep.subr.mxu0 0.0
  %309 = vmatpush1.xpose.msra.mxu0 0.0
  %310 = vmatprep.subr.mxu0 0.0
  %311 = vmatpush1.xpose.msra.mxu0 0.0
  %312 = vmatprep.subr.mxu0 0.0
  %313 = vmatpush1.xpose.msra.mxu0 0.0
  %314 = vmatprep.subr.mxu0 0.0
  %315 = vmatpush1.xpose.msra.mxu0 0.0
  %316 = vmatprep.subr.mxu0 0.0
  %317 = vmatpush1.xpose.msra.mxu0 0.0
  %318 = vmatprep.subr.mxu0 0.0
  %319 = vmatpush1.xpose.msra.mxu0 0.0
  %320 = vmatprep.subr.mxu0 0.0
  %321 = vmatpush1.xpose.msra.mxu0 0.0
  %322 = vmatprep.subr.mxu0 0.0
  %323 = vmatpush1.xpose.msra.mxu0 0.0
  %324 = vmatprep.subr.mxu0 0.0
  %325 = vmatpush1.xpose.msra.mxu0 0.0
  %326 = vmatprep.subr.mxu0 0.0
  %327 = vmatpush1.xpose.msra.mxu0 0.0
  %328 = vmatprep.subr.mxu0 0.0
  %329 = vmatpush1.xpose.msra.mxu0 0.0
  %330 = vmatprep.subr.mxu0 0.0
  %331 = vmatpush1.xpose.msra.mxu0 0.0
  %332 = vmatprep.subr.mxu0 0.0
  %333 = vmatpush1.xpose.msra.mxu0 0.0
  %334 = vmatprep.subr.mxu0 0.0
  %335 = vmatpush1.xpose.msra.mxu0 0.0
  %336 = vmatprep.subr.mxu0 0.0
  %337 = vmatpush1.xpose.msra.mxu0 0.0
  %338 = vmatprep.subr.mxu0 0.0
  %339 = vmatpush1.xpose.msra.mxu0 0.0
  %340 = vmatprep.subr.mxu0 0.0
  %341 = vmatpush1.xpose.msra.mxu0 0.0
  %342 = vmatprep.subr.mxu0 0.0
  %343 = vmatpush1.xpose.msra.mxu0 0.0
  %344 = vmatprep.subr.mxu0 0.0
  %345 = vmatpush1.xpose.msra.mxu0 0.0
  %346 = vmatprep.subr.mxu0 0.0
  %347 = vmatpush1.xpose.msra.mxu0 0.0
  %348 = vmatprep.subr.mxu0 0.0
  %349 = vmatpush1.xpose.msra.mxu0 0.0
  %350 = vmatprep.subr.mxu0 0.0
  %351 = vmatpush1.xpose.msra.mxu0 0.0
  %352 = vmatprep.mubr.f32.mxu0 0.0
  %353 = vmatmul.mubr.f32.gmra.mrb[0].mxu0 %v280
  %v354 = vpop.f32.mrb[0].mxu0
  %v355 = vadd.f32 0.0, %v354
  %v356 = vpop.f32.mrb[0].mxu0
  %357 = vmatprep.mubr.f32.mxu0 0.0
  %358 = vmatmul.mubr.f32.gmra.mrb[0].mxu0 %v283
  %v359 = vpop.f32.mrb[0].mxu0
  %v360 = vadd.f32 0.0, %v359
  %v361 = vpop.f32.mrb[0].mxu0
  %362 = vdwg.mxu0
  %v364 = vsel %vm110, %v92, 0
  %v367 = vsel %vm110, %v93, 0
  %v370 = vsel %vm110, %v105, 0
  %372 = vmatprep.subr.mxu0 0.0
  %373 = vmatpush1.xpose.msra.mxu0 %v370
  %374 = vmatprep.subr.mxu0 0.0
  %375 = vmatpush1.xpose.msra.mxu0 0.0
  %376 = vmatprep.subr.mxu0 0.0
  %377 = vmatpush1.xpose.msra.mxu0 0.0
  %378 = vmatprep.subr.mxu0 0.0
  %379 = vmatpush1.xpose.msra.mxu0 0.0
  %380 = vmatprep.subr.mxu0 0.0
  %381 = vmatpush1.xpose.msra.mxu0 0.0
  %382 = vmatprep.subr.mxu0 0.0
  %383 = vmatpush1.xpose.msra.mxu0 0.0
  %384 = vmatprep.subr.mxu0 0.0
  %385 = vmatpush1.xpose.msra.mxu0 0.0
  %386 = vmatprep.subr.mxu0 0.0
  %387 = vmatpush1.xpose.msra.mxu0 0.0
  %388 = vmatprep.subr.mxu0 0.0
  %389 = vmatpush1.xpose.msra.mxu0 0.0
  %390 = vmatprep.subr.mxu0 0.0
  %391 = vmatpush1.xpose.msra.mxu0 0.0
  %392 = vmatprep.subr.mxu0 0.0
  %393 = vmatpush1.xpose.msra.mxu0 0.0
  %394 = vmatprep.subr.mxu0 0.0
  %395 = vmatpush1.xpose.msra.mxu0 0.0
  %396 = vmatprep.subr.mxu0 0.0
  %397 = vmatpush1.xpose.msra.mxu0 0.0
  %398 = vmatprep.subr.mxu0 0.0
  %399 = vmatpush1.xpose.msra.mxu0 0.0
  %400 = vmatprep.subr.mxu0 0.0
  %401 = vmatpush1.xpose.msra.mxu0 0.0
  %402 = vmatprep.subr.mxu0 0.0
  %403 = vmatpush1.xpose.msra.mxu0 0.0
  %404 = vmatprep.subr.mxu0 0.0
  %405 = vmatpush1.xpose.msra.mxu0 0.0
  %406 = vmatprep.subr.mxu0 0.0
  %407 = vmatpush1.xpose.msra.mxu0 0.0
  %408 = vmatprep.subr.mxu0 0.0
  %409 = vmatpush1.xpose.msra.mxu0 0.0
  %410 = vmatprep.subr.mxu0 0.0
  %411 = vmatpush1.xpose.msra.mxu0 0.0
  %412 = vmatprep.subr.mxu0 0.0
  %413 = vmatpush1.xpose.msra.mxu0 0.0
  %414 = vmatprep.subr.mxu0 0.0
  %415 = vmatpush1.xpose.msra.mxu0 0.0
  %416 = vmatprep.subr.mxu0 0.0
  %417 = vmatpush1.xpose.msra.mxu0 0.0
  %418 = vmatprep.subr.mxu0 0.0
  %419 = vmatpush1.xpose.msra.mxu0 0.0
  %420 = vmatprep.subr.mxu0 0.0
  %421 = vmatpush1.xpose.msra.mxu0 0.0
  %422 = vmatprep.subr.mxu0 0.0
  %423 = vmatpush1.xpose.msra.mxu0 0.0
  %424 = vmatprep.subr.mxu0 0.0
  %425 = vmatpush1.xpose.msra.mxu0 0.0
  %426 = vmatprep.subr.mxu0 0.0
  %427 = vmatpush1.xpose.msra.mxu0 0.0
  %428 = vmatprep.subr.mxu0 0.0
  %429 = vmatpush1.xpose.msra.mxu0 0.0
  %430 = vmatprep.subr.mxu0 0.0
  %431 = vmatpush1.xpose.msra.mxu0 0.0
  %432 = vmatprep.subr.mxu0 0.0
  %433 = vmatpush1.xpose.msra.mxu0 0.0
  %434 = vmatprep.subr.mxu0 0.0
  %435 = vmatpush1.xpose.msra.mxu0 0.0
  %436 = vmatprep.mubr.f32.mxu0 0.0
  %437 = vmatmul.mubr.f32.gmra.mrb[0].mxu0 %v364
  %v438 = vpop.f32.mrb[0].mxu0
  %v439 = vadd.f32 0.0, %v438
  %v440 = vpop.f32.mrb[0].mxu0
  %441 = vmatprep.mubr.f32.mxu0 0.0
  %442 = vmatmul.mubr.f32.gmra.mrb[0].mxu0 %v367
  %v443 = vpop.f32.mrb[0].mxu0
  %v444 = vadd.f32 0.0, %v443
  %v445 = vpop.f32.mrb[0].mxu0
  %446 = vdwg.mxu0
  %v448 = vsel %vm110, %v94, 0
  %v451 = vsel %vm110, %v95, 0
  %v454 = vsel %vm110, %v106, 0
  %456 = vmatprep.subr.mxu0 0.0
  %457 = vmatpush1.xpose.msra.mxu0 %v454
  %458 = vmatprep.subr.mxu0 0.0
  %459 = vmatpush1.xpose.msra.mxu0 0.0
  %460 = vmatprep.subr.mxu0 0.0
  %461 = vmatpush1.xpose.msra.mxu0 0.0
  %462 = vmatprep.subr.mxu0 0.0
  %463 = vmatpush1.xpose.msra.mxu0 0.0
  %464 = vmatprep.subr.mxu0 0.0
  %465 = vmatpush1.xpose.msra.mxu0 0.0
  %466 = vmatprep.subr.mxu0 0.0
  %467 = vmatpush1.xpose.msra.mxu0 0.0
  %468 = vmatprep.subr.mxu0 0.0
  %469 = vmatpush1.xpose.msra.mxu0 0.0
  %470 = vmatprep.subr.mxu0 0.0
  %471 = vmatpush1.xpose.msra.mxu0 0.0
  %472 = vmatprep.subr.mxu0 0.0
  %473 = vmatpush1.xpose.msra.mxu0 0.0
  %474 = vmatprep.subr.mxu0 0.0
  %475 = vmatpush1.xpose.msra.mxu0 0.0
  %476 = vmatprep.subr.mxu0 0.0
  %477 = vmatpush1.xpose.msra.mxu0 0.0
  %478 = vmatprep.subr.mxu0 0.0
  %479 = vmatpush1.xpose.msra.mxu0 0.0
  %480 = vmatprep.subr.mxu0 0.0
  %481 = vmatpush1.xpose.msra.mxu0 0.0
  %482 = vmatprep.subr.mxu0 0.0
  %483 = vmatpush1.xpose.msra.mxu0 0.0
  %484 = vmatprep.subr.mxu0 0.0
  %485 = vmatpush1.xpose.msra.mxu0 0.0
  %486 = vmatprep.subr.mxu0 0.0
  %487 = vmatpush1.xpose.msra.mxu0 0.0
  %488 = vmatprep.subr.mxu0 0.0
  %489 = vmatpush1.xpose.msra.mxu0 0.0
  %490 = vmatprep.subr.mxu0 0.0
  %491 = vmatpush1.xpose.msra.mxu0 0.0
  %492 = vmatprep.subr.mxu0 0.0
  %493 = vmatpush1.xpose.msra.mxu0 0.0
  %494 = vmatprep.subr.mxu0 0.0
  %495 = vmatpush1.xpose.msra.mxu0 0.0
  %496 = vmatprep.subr.mxu0 0.0
  %497 = vmatpush1.xpose.msra.mxu0 0.0
  %498 = vmatprep.subr.mxu0 0.0
  %499 = vmatpush1.xpose.msra.mxu0 0.0
  %500 = vmatprep.subr.mxu0 0.0
  %501 = vmatpush1.xpose.msra.mxu0 0.0
  %502 = vmatprep.subr.mxu0 0.0
  %503 = vmatpush1.xpose.msra.mxu0 0.0
  %504 = vmatprep.subr.mxu0 0.0
  %505 = vmatpush1.xpose.msra.mxu0 0.0
  %506 = vmatprep.subr.mxu0 0.0
  %507 = vmatpush1.xpose.msra.mxu0 0.0
  %508 = vmatprep.subr.mxu0 0.0
  %509 = vmatpush1.xpose.msra.mxu0 0.0
  %510 = vmatprep.subr.mxu0 0.0
  %511 = vmatpush1.xpose.msra.mxu0 0.0
  %512 = vmatprep.subr.mxu0 0.0
  %513 = vmatpush1.xpose.msra.mxu0 0.0
  %514 = vmatprep.subr.mxu0 0.0
  %515 = vmatpush1.xpose.msra.mxu0 0.0
  %516 = vmatprep.subr.mxu0 0.0
  %517 = vmatpush1.xpose.msra.mxu0 0.0
  %518 = vmatprep.subr.mxu0 0.0
  %519 = vmatpush1.xpose.msra.mxu0 0.0
  %520 = vmatprep.mubr.f32.mxu0 0.0
  %521 = vmatmul.mubr.f32.gmra.mrb[0].mxu0 %v448
  %v522 = vpop.f32.mrb[0].mxu0
  %v523 = vadd.f32 0.0, %v522
  %v524 = vpop.f32.mrb[0].mxu0
  %525 = vmatprep.mubr.f32.mxu0 0.0
  %526 = vmatmul.mubr.f32.gmra.mrb[0].mxu0 %v451
  %v527 = vpop.f32.mrb[0].mxu0
  %v528 = vadd.f32 0.0, %v527
  %v529 = vpop.f32.mrb[0].mxu0
  %530 = vdwg.mxu0
  %v532 = vsel %vm110, %v96, 0
  %v535 = vsel %vm110, %v97, 0
  %v538 = vsel %vm110, %v107, 0
  %540 = vmatprep.subr.mxu0 0.0
  %541 = vmatpush1.xpose.msra.mxu0 %v538
  %542 = vmatprep.subr.mxu0 0.0
  %543 = vmatpush1.xpose.msra.mxu0 0.0
  %544 = vmatprep.subr.mxu0 0.0
  %545 = vmatpush1.xpose.msra.mxu0 0.0
  %546 = vmatprep.subr.mxu0 0.0
  %547 = vmatpush1.xpose.msra.mxu0 0.0
  %548 = vmatprep.subr.mxu0 0.0
  %549 = vmatpush1.xpose.msra.mxu0 0.0
  %550 = vmatprep.subr.mxu0 0.0
  %551 = vmatpush1.xpose.msra.mxu0 0.0
  %552 = vmatprep.subr.mxu0 0.0
  %553 = vmatpush1.xpose.msra.mxu0 0.0
  %554 = vmatprep.subr.mxu0 0.0
  %555 = vmatpush1.xpose.msra.mxu0 0.0
  %556 = vmatprep.subr.mxu0 0.0
  %557 = vmatpush1.xpose.msra.mxu0 0.0
  %558 = vmatprep.subr.mxu0 0.0
  %559 = vmatpush1.xpose.msra.mxu0 0.0
  %560 = vmatprep.subr.mxu0 0.0
  %561 = vmatpush1.xpose.msra.mxu0 0.0
  %562 = vmatprep.subr.mxu0 0.0
  %563 = vmatpush1.xpose.msra.mxu0 0.0
  %564 = vmatprep.subr.mxu0 0.0
  %565 = vmatpush1.xpose.msra.mxu0 0.0
  %566 = vmatprep.subr.mxu0 0.0
  %567 = vmatpush1.xpose.msra.mxu0 0.0
  %568 = vmatprep.subr.mxu0 0.0
  %569 = vmatpush1.xpose.msra.mxu0 0.0
  %570 = vmatprep.subr.mxu0 0.0
  %571 = vmatpush1.xpose.msra.mxu0 0.0
  %572 = vmatprep.subr.mxu0 0.0
  %573 = vmatpush1.xpose.msra.mxu0 0.0
  %574 = vmatprep.subr.mxu0 0.0
  %575 = vmatpush1.xpose.msra.mxu0 0.0
  %576 = vmatprep.subr.mxu0 0.0
  %577 = vmatpush1.xpose.msra.mxu0 0.0
  %578 = vmatprep.subr.mxu0 0.0
  %579 = vmatpush1.xpose.msra.mxu0 0.0
  %580 = vmatprep.subr.mxu0 0.0
  %581 = vmatpush1.xpose.msra.mxu0 0.0
  %582 = vmatprep.subr.mxu0 0.0
  %583 = vmatpush1.xpose.msra.mxu0 0.0
  %584 = vmatprep.subr.mxu0 0.0
  %585 = vmatpush1.xpose.msra.mxu0 0.0
  %586 = vmatprep.subr.mxu0 0.0
  %587 = vmatpush1.xpose.msra.mxu0 0.0
  %588 = vmatprep.subr.mxu0 0.0
  %589 = vmatpush1.xpose.msra.mxu0 0.0
  %590 = vmatprep.subr.mxu0 0.0
  %591 = vmatpush1.xpose.msra.mxu0 0.0
  %592 = vmatprep.subr.mxu0 0.0
  %593 = vmatpush1.xpose.msra.mxu0 0.0
  %594 = vmatprep.subr.mxu0 0.0
  %595 = vmatpush1.xpose.msra.mxu0 0.0
  %596 = vmatprep.subr.mxu0 0.0
  %597 = vmatpush1.xpose.msra.mxu0 0.0
  %598 = vmatprep.subr.mxu0 0.0
  %599 = vmatpush1.xpose.msra.mxu0 0.0
  %600 = vmatprep.subr.mxu0 0.0
  %601 = vmatpush1.xpose.msra.mxu0 0.0
  %602 = vmatprep.subr.mxu0 0.0
  %603 = vmatpush1.xpose.msra.mxu0 0.0
  %604 = vmatprep.mubr.f32.mxu0 0.0
  %605 = vmatmul.mubr.f32.gmra.mrb[0].mxu0 %v532
  %v606 = vpop.f32.mrb[0].mxu0
  %v607 = vadd.f32 0.0, %v606
  %v608 = vpop.f32.mrb[0].mxu0
  %609 = vmatprep.mubr.f32.mxu0 0.0
  %610 = vmatmul.mubr.f32.gmra.mrb[0].mxu0 %v535
  %v611 = vpop.f32.mrb[0].mxu0
  %v612 = vadd.f32 0.0, %v611
  %v613 = vpop.f32.mrb[0].mxu0
  %614 = vdwg.mxu0
  %v616 = vsel %vm110, %v98, 0
  %v619 = vsel %vm110, %v99, 0
  %v622 = vsel %vm110, %v108, 0
  %624 = vmatprep.subr.mxu0 0.0
  %625 = vmatpush1.xpose.msra.mxu0 %v622
  %626 = vmatprep.subr.mxu0 0.0
  %627 = vmatpush1.xpose.msra.mxu0 0.0
  %628 = vmatprep.subr.mxu0 0.0
  %629 = vmatpush1.xpose.msra.mxu0 0.0
  %630 = vmatprep.subr.mxu0 0.0
  %631 = vmatpush1.xpose.msra.mxu0 0.0
  %632 = vmatprep.subr.mxu0 0.0
  %633 = vmatpush1.xpose.msra.mxu0 0.0
  %634 = vmatprep.subr.mxu0 0.0
  %635 = vmatpush1.xpose.msra.mxu0 0.0
  %636 = vmatprep.subr.mxu0 0.0
  %637 = vmatpush1.xpose.msra.mxu0 0.0
  %638 = vmatprep.subr.mxu0 0.0
  %639 = vmatpush1.xpose.msra.mxu0 0.0
  %640 = vmatprep.subr.mxu0 0.0
  %641 = vmatpush1.xpose.msra.mxu0 0.0
  %642 = vmatprep.subr.mxu0 0.0
  %643 = vmatpush1.xpose.msra.mxu0 0.0
  %644 = vmatprep.subr.mxu0 0.0
  %645 = vmatpush1.xpose.msra.mxu0 0.0
  %646 = vmatprep.subr.mxu0 0.0
  %647 = vmatpush1.xpose.msra.mxu0 0.0
  %648 = vmatprep.subr.mxu0 0.0
  %649 = vmatpush1.xpose.msra.mxu0 0.0
  %650 = vmatprep.subr.mxu0 0.0
  %651 = vmatpush1.xpose.msra.mxu0 0.0
  %652 = vmatprep.subr.mxu0 0.0
  %653 = vmatpush1.xpose.msra.mxu0 0.0
  %654 = vmatprep.subr.mxu0 0.0
  %655 = vmatpush1.xpose.msra.mxu0 0.0
  %656 = vmatprep.subr.mxu0 0.0
  %657 = vmatpush1.xpose.msra.mxu0 0.0
  %658 = vmatprep.subr.mxu0 0.0
  %659 = vmatpush1.xpose.msra.mxu0 0.0
  %660 = vmatprep.subr.mxu0 0.0
  %661 = vmatpush1.xpose.msra.mxu0 0.0
  %662 = vmatprep.subr.mxu0 0.0
  %663 = vmatpush1.xpose.msra.mxu0 0.0
  %664 = vmatprep.subr.mxu0 0.0
  %665 = vmatpush1.xpose.msra.mxu0 0.0
  %666 = vmatprep.subr.mxu0 0.0
  %667 = vmatpush1.xpose.msra.mxu0 0.0
  %668 = vmatprep.subr.mxu0 0.0
  %669 = vmatpush1.xpose.msra.mxu0 0.0
  %670 = vmatprep.subr.mxu0 0.0
  %671 = vmatpush1.xpose.msra.mxu0 0.0
  %672 = vmatprep.subr.mxu0 0.0
  %673 = vmatpush1.xpose.msra.mxu0 0.0
  %674 = vmatprep.subr.mxu0 0.0
  %675 = vmatpush1.xpose.msra.mxu0 0.0
  %676 = vmatprep.subr.mxu0 0.0
  %677 = vmatpush1.xpose.msra.mxu0 0.0
  %678 = vmatprep.subr.mxu0 0.0
  %679 = vmatpush1.xpose.msra.mxu0 0.0
  %680 = vmatprep.subr.mxu0 0.0
  %681 = vmatpush1.xpose.msra.mxu0 0.0
  %682 = vmatprep.subr.mxu0 0.0
  %683 = vmatpush1.xpose.msra.mxu0 0.0
  %684 = vmatprep.subr.mxu0 0.0
  %685 = vmatpush1.xpose.msra.mxu0 0.0
  %686 = vmatprep.subr.mxu0 0.0
  %687 = vmatpush1.xpose.msra.mxu0 0.0
  %688 = vmatprep.mubr.f32.mxu0 0.0
  %689 = vmatmul.mubr.f32.gmra.mrb[0].mxu0 %v616
  %v690 = vpop.f32.mrb[0].mxu0
  %v691 = vadd.f32 0.0, %v690
  %v692 = vpop.f32.mrb[0].mxu0
  %693 = vmatprep.mubr.f32.mxu0 0.0
  %694 = vmatmul.mubr.f32.gmra.mrb[0].mxu0 %v619
  %v695 = vpop.f32.mrb[0].mxu0
  %v696 = vadd.f32 0.0, %v695
  %v697 = vpop.f32.mrb[0].mxu0
  %698 = vdwg.mxu0
  %v700 = vsel %vm110, %v100, 0
  %v703 = vsel %vm110, %v101, 0
  %v706 = vsel %vm110, %v109, 0
  %708 = vmatprep.subr.mxu0 0.0
  %709 = vmatpush1.xpose.msra.mxu0 %v706
  %710 = vmatprep.subr.mxu0 0.0
  %711 = vmatpush1.xpose.msra.mxu0 0.0
  %712 = vmatprep.subr.mxu0 0.0
  %713 = vmatpush1.xpose.msra.mxu0 0.0
  %714 = vmatprep.subr.mxu0 0.0
  %715 = vmatpush1.xpose.msra.mxu0 0.0
  %716 = vmatprep.subr.mxu0 0.0
  %717 = vmatpush1.xpose.msra.mxu0 0.0
  %718 = vmatprep.subr.mxu0 0.0
  %719 = vmatpush1.xpose.msra.mxu0 0.0
  %720 = vmatprep.subr.mxu0 0.0
  %721 = vmatpush1.xpose.msra.mxu0 0.0
  %722 = vmatprep.subr.mxu0 0.0
  %723 = vmatpush1.xpose.msra.mxu0 0.0
  %724 = vmatprep.subr.mxu0 0.0
  %725 = vmatpush1.xpose.msra.mxu0 0.0
  %726 = vmatprep.subr.mxu0 0.0
  %727 = vmatpush1.xpose.msra.mxu0 0.0
  %728 = vmatprep.subr.mxu0 0.0
  %729 = vmatpush1.xpose.msra.mxu0 0.0
  %730 = vmatprep.subr.mxu0 0.0
  %731 = vmatpush1.xpose.msra.mxu0 0.0
  %732 = vmatprep.subr.mxu0 0.0
  %733 = vmatpush1.xpose.msra.mxu0 0.0
  %734 = vmatprep.subr.mxu0 0.0
  %735 = vmatpush1.xpose.msra.mxu0 0.0
  %736 = vmatprep.subr.mxu0 0.0
  %737 = vmatpush1.xpose.msra.mxu0 0.0
  %738 = vmatprep.subr.mxu0 0.0
  %739 = vmatpush1.xpose.msra.mxu0 0.0
  %740 = vmatprep.subr.mxu0 0.0
  %741 = vmatpush1.xpose.msra.mxu0 0.0
  %742 = vmatprep.subr.mxu0 0.0
  %743 = vmatpush1.xpose.msra.mxu0 0.0
  %744 = vmatprep.subr.mxu0 0.0
  %745 = vmatpush1.xpose.msra.mxu0 0.0
  %746 = vmatprep.subr.mxu0 0.0
  %747 = vmatpush1.xpose.msra.mxu0 0.0
  %748 = vmatprep.subr.mxu0 0.0
  %749 = vmatpush1.xpose.msra.mxu0 0.0
  %750 = vmatprep.subr.mxu0 0.0
  %751 = vmatpush1.xpose.msra.mxu0 0.0
  %752 = vmatprep.subr.mxu0 0.0
  %753 = vmatpush1.xpose.msra.mxu0 0.0
  %754 = vmatprep.subr.mxu0 0.0
  %755 = vmatpush1.xpose.msra.mxu0 0.0
  %756 = vmatprep.subr.mxu0 0.0
  %757 = vmatpush1.xpose.msra.mxu0 0.0
  %758 = vmatprep.subr.mxu0 0.0
  %759 = vmatpush1.xpose.msra.mxu0 0.0
  %760 = vmatprep.subr.mxu0 0.0
  %761 = vmatpush1.xpose.msra.mxu0 0.0
  %762 = vmatprep.subr.mxu0 0.0
  %763 = vmatpush1.xpose.msra.mxu0 0.0
  %764 = vmatprep.subr.mxu0 0.0
  %765 = vmatpush1.xpose.msra.mxu0 0.0
  %766 = vmatprep.subr.mxu0 0.0
  %767 = vmatpush1.xpose.msra.mxu0 0.0
  %768 = vmatprep.subr.mxu0 0.0
  %769 = vmatpush1.xpose.msra.mxu0 0.0
  %770 = vmatprep.subr.mxu0 0.0
  %771 = vmatpush1.xpose.msra.mxu0 0.0
  %772 = vmatprep.mubr.f32.mxu0 0.0
  %773 = vmatmul.mubr.f32.gmra.mrb[0].mxu0 %v700
  %v774 = vpop.f32.mrb[0].mxu0
  %v775 = vadd.f32 0.0, %v774
  %v776 = vpop.f32.mrb[0].mxu0
  %777 = vmatprep.mubr.f32.mxu0 0.0
  %778 = vmatmul.mubr.f32.gmra.mrb[0].mxu0 %v703
  %v779 = vpop.f32.mrb[0].mxu0
  %v780 = vadd.f32 0.0, %v779
  %v781 = vpop.f32.mrb[0].mxu0
  %782 = vdwg.mxu0
  %783 = vst.msk [vmem:[%s3] sm:$0xff] %vm110, %v187
  %784 = vst.msk [vmem:[%s3 + $0x8] sm:$0xff] %vm110, %v192
  %785 = vst.msk [vmem:[%s3 + $0x10] sm:$0xff] %vm110, %v271
  %786 = vst.msk [vmem:[%s3 + $0x18] sm:$0xff] %vm110, %v276
  %787 = vst.msk [vmem:[%s3 + $0x20] sm:$0xff] %vm110, %v355
  %788 = vst.msk [vmem:[%s3 + $0x28] sm:$0xff] %vm110, %v360
  %789 = vst.msk [vmem:[%s3 + $0x30] sm:$0xff] %vm110, %v439
  %790 = vst.msk [vmem:[%s3 + $0x38] sm:$0xff] %vm110, %v444
  %791 = vst.msk [vmem:[%s3 + $0x40] sm:$0xff] %vm110, %v523
  %792 = vst.msk [vmem:[%s3 + $0x48] sm:$0xff] %vm110, %v528
  %793 = vst.msk [vmem:[%s3 + $0x50] sm:$0xff] %vm110, %v607
  %794 = vst.msk [vmem:[%s3 + $0x58] sm:$0xff] %vm110, %v612
  %795 = vst.msk [vmem:[%s3 + $0x60] sm:$0xff] %vm110, %v691
  %796 = vst.msk [vmem:[%s3 + $0x68] sm:$0xff] %vm110, %v696
  %797 = vst.msk [vmem:[%s3 + $0x70] sm:$0xff] %vm110, %v775
  %798 = vst.msk [vmem:[%s3 + $0x78] sm:$0xff] %vm110, %v780
  // Predicated region
  $region14: #{tpu_custom_call.1} parent=0 // pred_check
    _
  $region15: #{tpu_custom_call.1} parent=0 // pred_check_branch
    %800 = sbr.rel (0) target = $region17
  $region16: #{tpu_custom_call.1} parent=0 // pred_region
    _
  $region17: #{tpu_custom_call.1} parent=0 // pred_fallthru
    _
  // Predicated region
  $region18: #{tpu_custom_call.1} parent=0 // pred_check
    _
  $region19: #{tpu_custom_call.1} parent=0 // pred_check_branch
    %802 = sbr.rel (0) target = $region21
  $region20: #{tpu_custom_call.1} parent=0 // pred_region
    _
  $region21: #{tpu_custom_call.1} parent=0 // pred_fallthru
    _

</llo_original>
